<compile_context>
chip_gen: v5e
topology: v5e:2x2
jax: 0.10.0
libtpu: 0.0.40
codegen_flags: <defaults>
</compile_context>

<pallas_src>
import functools

import jax
import jax.numpy as jnp
from jax.experimental import pallas as pl
from jax.experimental.pallas import tpu as pltpu

_LANES = 128
_BLOCK_BYTES_DEFAULT = 4 << 20   # ~4 MiB of HBM per grid step (v5e / v6e)
_BLOCK_BYTES_V7X = 8 << 20       # v7x: 3.2 TB/s HBM -> bigger blocks per step
_SMALL_INPUT_ELEMS = 65536       # below this, kernel launch/prologue dominates


def _tpu_cores_info():
    """Best-effort chip sniffing (perf-only; any failure falls back safely)."""
    kind = ""
    try:
        kind = (getattr(jax.devices()[0], "device_kind", "") or "").lower()
    except Exception:
        pass
    is_v7x = ("v7" in kind) or ("7x" in kind)
    # 2 TensorCores per chip on v7x (and v4/v5p megacore parts); single-TC
    # v5e/v6e keep nsplits=1 so the leading grid axis is pure overhead-free.
    multi_tc = is_v7x or ("v4" in kind) or ("v5p" in kind)
    return (2 if multi_tc else 1), is_v7x


def _reduce_kernel(x_ref, o_ref, *, rows, block_rows, nblocks, nsteps):
    """Streaming sum of a (rows, 128) slab into a (1, 128) vector accumulator.

    Grid: (nsplits, nsteps). Axis 0 ("parallel") splits the row-block range
    across TensorCores (megacore on v7x); axis 1 ("arbitrary") walks the row
    blocks of this core's half. o_ref is the per-core (1, 128) partial,
    VMEM-resident across axis 1 (accumulator pattern).
    """
    p = pl.program_id(0)
    j = pl.program_id(1)

    @pl.when(j == 0)
    def _init():
        o_ref[...] = jnp.zeros_like(o_ref)

    # Logical row-block index this step should cover.  The input index_map
    # clamps it into range; clamped/duplicated blocks contribute zero via the
    # edge mask below (the condition covers both the ragged last block and
    # any clamped duplicates, independent of the dtype-dependent block_rows).
    logical = p * nsteps + j

    x = x_ref[...]                       # (block_rows, 128), native dtype

    @pl.when(logical < nblocks - 1)
    def _bulk():                         # fully in-bounds block, fused cast+sum
        o_ref[...] += jnp.sum(x, axis=0, keepdims=True, dtype=jnp.float32)

    @pl.when(logical >= nblocks - 1)
    def _edge():                         # ragged / clamped block: row mask
        row0 = logical * block_rows
        rid = row0 + jax.lax.broadcasted_iota(jnp.int32, x.shape, 0)
        xm = jnp.where(rid < rows, x, jnp.zeros_like(x))
        o_ref[...] += jnp.sum(xm, axis=0, keepdims=True, dtype=jnp.float32)


def _pallas_sum(x2d, rows, *, block_bytes, num_cores, force_splits=None):
    """Sum of all elements of a (rows, 128) slab via the Pallas kernel (f32)."""
    itemsize = jnp.dtype(x2d.dtype).itemsize

    # Dtype-aware block sizing: ~block_bytes of HBM per grid step, multiple of
    # 8 sublanes (f32: 8192 rows @ 4 MiB, bf16: 16384 rows, v7x: 2x that).
    target_rows = max(8, (int(block_bytes) // (_LANES * itemsize)) // 8 * 8)
    block_rows = rows if rows <= target_rows else target_rows
    nblocks = -(-rows // block_rows)

    # 2-way split only when two TensorCores exist (v7x); at most one duplicated
    # (masked) block of redundant DMA when nblocks is odd.
    if force_splits is not None:
        nsplits = force_splits if nblocks >= 2 else 1
    else:
        nsplits = 2 if (num_cores >= 2 and nblocks >= 2) else 1
    nsteps = -(-nblocks // nsplits)

    # VMEM budget: double-buffered native-dtype blocks plus a possible f32
    # temporary for the fused-cast reduce on sub-32-bit dtypes, with slack.
    temp_bytes = 0 if itemsize >= 4 else block_rows * _LANES * 4
    vmem_need = 2 * block_rows * _LANES * itemsize + temp_bytes + (2 << 20)
    vmem_limit = int(min(max(vmem_need, 32 << 20), 48 << 20))

    kernel = functools.partial(_reduce_kernel, rows=rows, block_rows=block_rows,
                               nblocks=nblocks, nsteps=nsteps)
    cost = pl.CostEstimate(
        flops=rows * _LANES, transcendentals=0,
        bytes_accessed=rows * _LANES * itemsize + nsplits * _LANES * 4)

    partials = pl.pallas_call(
        kernel,
        out_shape=jax.ShapeDtypeStruct((nsplits, 1, _LANES), jnp.float32),
        grid=(nsplits, nsteps),
        in_specs=[pl.BlockSpec(
            (block_rows, _LANES),
            lambda p, j: (jnp.minimum(p * nsteps + j, nblocks - 1), 0))],
        out_specs=pl.BlockSpec((None, 1, _LANES), lambda p, j: (p, 0, 0)),
        compiler_params=pltpu.CompilerParams(
            dimension_semantics=("parallel", "arbitrary"),
            vmem_limit_bytes=vmem_limit),
        cost_estimate=cost,
    )(x2d)
    return jnp.sum(partials)          # tiny finishing reduce (<= 2*128 floats)


def base_module_reduce(loss, reduction="mean", *,
                       min_pallas_elements=_SMALL_INPUT_ELEMS,
                       block_bytes=None, force_splits=None):
    """Pallas equivalent of BaseModule.reduce(loss, reduction)."""
    if reduction not in ("mean", "sum"):
        return loss                   # matches the PyTorch 'else: return loss'

    x = jnp.asarray(loss)
    n = x.size

    # Tiny losses: launch + pipeline prologue dominate; XLA's fused reduce wins.
    # TODO(synk): integer/bool losses also take this fallback (jnp semantics);
    # torch.mean would raise on integer dtypes.
    if (n == 0 or n < max(min_pallas_elements, _LANES)
            or not jnp.issubdtype(x.dtype, jnp.floating)):
        return jnp.mean(x) if reduction == "mean" else jnp.sum(x)

    num_cores, is_v7x = _tpu_cores_info()
    if block_bytes is None:
        block_bytes = _BLOCK_BYTES_V7X if is_v7x else _BLOCK_BYTES_DEFAULT

    flat = x.reshape(-1)              # metadata-only for a contiguous array
    n_main = (n // _LANES) * _LANES   # 128-aligned prefix handled by Pallas
    rows = n_main // _LANES
    main = (flat if n_main == n else flat[:n_main]).reshape(rows, _LANES)

    total = _pallas_sum(main, rows, block_bytes=block_bytes,
                        num_cores=num_cores, force_splits=force_splits)
    if n_main != n:
        # <128-element lane tail: tiny XLA sum instead of a full jnp.pad copy
        # (which would add an extra full HBM read+write pass before the kernel).
        total = total + jnp.sum(flat[n_main:], dtype=jnp.float32)

    if reduction == "mean":
        total = total / jnp.float32(n)      # divide by the TRUE element count
    return total.astype(x.dtype)            # torch.mean/sum preserve loss dtype


def base_module_unsqueeze(output, target):
    """Pallas-side equivalent of BaseModule.unsqueeze (pure shape glue)."""
    if output.ndim == 1:
        output = output[None, :]
    if target.ndim == 1:
        target = target[None, :]
    return output, target


def base_module_forward(*args):
    # TODO(synk): BaseModule.forward is abstract in the PyTorch module (no
    # computation to translate); training_step/loss_calculation are host-side
    # training loops, not kernel work.
    raise NotImplementedError('subclasses must override forward()!')


if __name__ == "__main__":
    key = jax.random.PRNGKey(0)
    k1, k2, k3 = jax.random.split(key, 3)

    # Canonical small element-wise loss (NCHW), forced through the Pallas path.
    loss = jax.random.normal(k1, (2, 4, 16, 16), dtype=jnp.float32)
    mean_val = base_module_reduce(loss, "mean", min_pallas_elements=1)
    sum_val = base_module_reduce(loss, "sum", min_pallas_elements=1)
    ident = base_module_reduce(loss, "none")
    # Force a tiny block + 2-way split: exercises bulk branch, edge branch,
    # per-split accumulator init, and the split path on every chip generation.
    mean_mb = base_module_reduce(loss, "mean", min_pallas_elements=1,
                                 block_bytes=4096, force_splits=2)

    # Larger bf16 loss: exercises dtype-aware block sizing and native-bf16
    # streaming with the fused f32-accumulation reduce.
    big = jax.random.normal(k2, (17, 8, 64, 64), dtype=jnp.bfloat16)   # 557056 elems
    big_mean = base_module_reduce(big, "mean")
    big_sum = base_module_reduce(big, "sum")
    # Multi-block bf16 with an odd block count + forced 2-way split: exercises
    # the clamped duplicate-block masking and ragged last row-block.
    big_sum_mb = base_module_reduce(big, "sum", block_bytes=256 * 1024,
                                    force_splits=2)

    # numel % 128 != 0: exercises the aligned-prefix + XLA-tail path (no pad).
    ragged = jax.random.normal(k3, (3, 5, 7, 11), dtype=jnp.float32)   # 1155 elems
    rag_sum = base_module_reduce(ragged, "sum", min_pallas_elements=1)
    rag_mean = base_module_reduce(ragged, "mean", min_pallas_elements=1)

    jax.block_until_ready((mean_val, sum_val, ident, mean_mb, big_mean,
                           big_sum, big_sum_mb, rag_sum, rag_mean))

    # Reference checks against plain JAX (mirrors torch.mean / torch.sum).
    assert jnp.allclose(mean_val, jnp.mean(loss), atol=1e-5, rtol=1e-5)
    assert jnp.allclose(sum_val, jnp.sum(loss), atol=1e-3, rtol=1e-5)
    assert jnp.allclose(mean_mb, jnp.mean(loss), atol=1e-5, rtol=1e-5)
    assert ident.shape == loss.shape

    big_f32 = big.astype(jnp.float32)
    assert jnp.allclose(big_mean.astype(jnp.float32), jnp.mean(big_f32),
                        atol=1e-4, rtol=2e-2)
    assert jnp.allclose(big_sum.astype(jnp.float32), jnp.sum(big_f32),
                        atol=16.0, rtol=2e-2)
    assert jnp.allclose(big_sum_mb.astype(jnp.float32), jnp.sum(big_f32),
                        atol=16.0, rtol=2e-2)

    assert jnp.allclose(rag_sum, jnp.sum(ragged), atol=1e-3, rtol=1e-5)
    assert jnp.allclose(rag_mean, jnp.mean(ragged), atol=1e-5, rtol=1e-5)

    # unsqueeze helper sanity check.
    o, t = base_module_unsqueeze(jnp.ones((8,)), jnp.zeros((8,)))
    assert o.shape == (1, 8) and t.shape == (1, 8)

    print("KERNEL_OK")
</pallas_src>

<mosaic_0001>
module attributes {stable_mosaic.version = 11 : i64} {
  func.func @_reduce_kernel(%arg0: i32, %arg1: i32, %arg2: memref<16x128xf32, #tpu.memory_space<vmem>>, %arg3: memref<1x1x128xf32, #tpu.memory_space<vmem>>) attributes {dimension_semantics = [#tpu.dimension_semantics<parallel>, #tpu.dimension_semantics<arbitrary>], iteration_bounds = array<i64: 1, 1>, scalar_prefetch = 0 : i64, scratch_operands = 0 : i64, tpu.core_type = #tpu.core_type<tc>, window_params = [{transform_indices = @transform_0, window_bounds = array<i64: 16, 128>}, {transform_indices = @transform_1, window_bounds = array<i64: 1, 1, 128>}]} {
    %c0_i32 = arith.constant 0 : i32
    %0 = arith.cmpi eq, %arg1, %c0_i32 : i32
    %1 = arith.extui %0 : i1 to i32
    %c0_i32_0 = arith.constant 0 : i32
    %2 = arith.cmpi ne, %1, %c0_i32_0 : i32
    scf.if %2 {
      %cst = arith.constant 0.000000e+00 : f32
      %12 = vector.broadcast %cst : f32 to vector<1x128xf32>
      %c0_6 = arith.constant 0 : index
      %c0_7 = arith.constant 0 : index
      %c0_8 = arith.constant 0 : index
      %13 = vector.load %arg3[%c0_6, %c0_7, %c0_8] : memref<1x1x128xf32, #tpu.memory_space<vmem>>, vector<1x1x128xf32>
      %14 = vector.shape_cast %13 : vector<1x1x128xf32> to vector<1x128xf32>
      %15 = vector.shape_cast %12 : vector<1x128xf32> to vector<1x1x128xf32>
      tpu.vector_store %arg3[%c0_6, %c0_7, %c0_8], %15 {strides = array<i32>} : memref<1x1x128xf32, #tpu.memory_space<vmem>>, vector<1x1x128xf32>,
    } else {
    }
    %c1_i32 = arith.constant 1 : i32
    %3 = arith.muli %arg0, %c1_i32 : i32
    %4 = arith.addi %3, %arg1 : i32
    %c0 = arith.constant 0 : index
    %c0_1 = arith.constant 0 : index
    %5 = vector.load %arg2[%c0, %c0_1] : memref<16x128xf32, #tpu.memory_space<vmem>>, vector<16x128xf32>
    %c0_i32_2 = arith.constant 0 : i32
    %6 = arith.cmpi slt, %4, %c0_i32_2 : i32
    %7 = arith.extui %6 : i1 to i32
    %c0_i32_3 = arith.constant 0 : i32
    %8 = arith.cmpi ne, %7, %c0_i32_3 : i32
    scf.if %8 {
      %c0_6 = arith.constant 0 : index
      %c0_7 = arith.constant 0 : index
      %c0_8 = arith.constant 0 : index
      %12 = vector.load %arg3[%c0_6, %c0_7, %c0_8] : memref<1x1x128xf32, #tpu.memory_space<vmem>>, vector<1x1x128xf32>
      %13 = vector.shape_cast %12 : vector<1x1x128xf32> to vector<1x128xf32>
      %cst = arith.constant dense<0.000000e+00> : vector<128xf32>
      %14 = vector.multi_reduction <add>, %5, %cst [0] : vector<16x128xf32> to vector<128xf32>
      %15 = vector.shape_cast %14 : vector<128xf32> to vector<1x128xf32>
      %16 = arith.addf %13, %15 : vector<1x128xf32>
      %c0_9 = arith.constant 0 : index
      %c0_10 = arith.constant 0 : index
      %c0_11 = arith.constant 0 : index
      %17 = vector.load %arg3[%c0_9, %c0_10, %c0_11] : memref<1x1x128xf32, #tpu.memory_space<vmem>>, vector<1x1x128xf32>
      %18 = vector.shape_cast %17 : vector<1x1x128xf32> to vector<1x128xf32>
      %19 = vector.shape_cast %16 : vector<1x128xf32> to vector<1x1x128xf32>
      tpu.vector_store %arg3[%c0_9, %c0_10, %c0_11], %19 {strides = array<i32>} : memref<1x1x128xf32, #tpu.memory_space<vmem>>, vector<1x1x128xf32>,
    } else {
    }
    %c0_i32_4 = arith.constant 0 : i32
    %9 = arith.cmpi sge, %4, %c0_i32_4 : i32
    %10 = arith.extui %9 : i1 to i32
    %c0_i32_5 = arith.constant 0 : i32
    %11 = arith.cmpi ne, %10, %c0_i32_5 : i32
    scf.if %11 {
      %c16_i32 = arith.constant 16 : i32
      %12 = arith.muli %4, %c16_i32 : i32
      %13 = tpu.iota {dimensions = array<i32: 0>} : vector<16x128xi32>
      %14 = vector.broadcast %12 : i32 to vector<16x128xi32>
      %15 = arith.addi %14, %13 : vector<16x128xi32>
      %c16_i32_6 = arith.constant 16 : i32
      %16 = vector.broadcast %c16_i32_6 : i32 to vector<16x128xi32>
      %17 = arith.cmpi slt, %15, %16 : vector<16x128xi32>
      %cst = arith.constant 0.000000e+00 : f32
      %18 = vector.broadcast %cst : f32 to vector<16x128xf32>
      %19 = arith.select %17, %5, %18 : vector<16x128xi1>, vector<16x128xf32>
      %c0_7 = arith.constant 0 : index
      %c0_8 = arith.constant 0 : index
      %c0_9 = arith.constant 0 : index
      %20 = vector.load %arg3[%c0_7, %c0_8, %c0_9] : memref<1x1x128xf32, #tpu.memory_space<vmem>>, vector<1x1x128xf32>
      %21 = vector.shape_cast %20 : vector<1x1x128xf32> to vector<1x128xf32>
      %cst_10 = arith.constant dense<0.000000e+00> : vector<128xf32>
      %22 = vector.multi_reduction <add>, %19, %cst_10 [0] : vector<16x128xf32> to vector<128xf32>
      %23 = vector.shape_cast %22 : vector<128xf32> to vector<1x128xf32>
      %24 = arith.addf %21, %23 : vector<1x128xf32>
      %c0_11 = arith.constant 0 : index
      %c0_12 = arith.constant 0 : index
      %c0_13 = arith.constant 0 : index
      %25 = vector.load %arg3[%c0_11, %c0_12, %c0_13] : memref<1x1x128xf32, #tpu.memory_space<vmem>>, vector<1x1x128xf32>
      %26 = vector.shape_cast %25 : vector<1x1x128xf32> to vector<1x128xf32>
      %27 = vector.shape_cast %24 : vector<1x128xf32> to vector<1x1x128xf32>
      tpu.vector_store %arg3[%c0_11, %c0_12, %c0_13], %27 {strides = array<i32>} : memref<1x1x128xf32, #tpu.memory_space<vmem>>, vector<1x1x128xf32>,
    } else {
    }
    return
  }
  func.func @transform_0(%arg0: i32, %arg1: i32) -> (i32, i32) {
    %c1_i32 = arith.constant 1 : i32
    %0 = arith.muli %arg0, %c1_i32 : i32
    %1 = arith.addi %0, %arg1 : i32
    %c0_i32 = arith.constant 0 : i32
    %2 = arith.minsi %1, %c0_i32 : i32
    %c0_i32_0 = arith.constant 0 : i32
    %c0_i32_1 = arith.constant 0 : i32
    return %2, %c0_i32_0 : i32, i32
  }
  func.func @transform_1(%arg0: i32, %arg1: i32) -> (i32, i32, i32) {
    %c0_i32 = arith.constant 0 : i32
    %c0_i32_0 = arith.constant 0 : i32
    %c0_i32_1 = arith.constant 0 : i32
    return %arg0, %c0_i32, %c0_i32_0 : i32, i32, i32
  }
}

</mosaic_0001>

<llo_original>
// kernel: tpu_custom_call.1
$region0: #{tpu_custom_call.1}
  #allocation0 [shape = 'u32[]', space=smem, size = 0x4, offset = 0x4, fixed_abs, tag = 'smem constant byte address 0x4 - core index']
  #allocation1 [shape = 'u32[72,128]{1,0:T(1,128)}', space=vmem, size = 0x9000, scoped, tag = 'internal scratch']
  %s0 = inlined_call_operand.hbm [shape: f32[16,128], index: 0, kind: input, shape index: {}]
  %s1 = inlined_call_operand.hbm [shape: f32[1,1,128], index: 1, kind: output, shape index: {}]
  %s2 = sld [smem:[#allocation0]]
  $region30: #{tpu_custom_call.1} parent=0
    _
  %s4 = ssub.s32 1, %s2
  %s5 = scalar_select 0, %s4, %s2
  $region1: #{tpu_custom_call.1} parent=0
    #allocation2 [shape = 'u8[8192]{0}', space=vmem, size = 0x2000, scoped, tag = 'input window, operand 0, single buffered']
    #allocation3 [shape = 's32[1]{0}', space=sflag, size = 0x4, scoped, tag = 'scoped memory for tpu_custom_call.1']
    #allocation4 [shape = 's32[1]{0}', space=sflag, size = 0x4, scoped, tag = 'scoped memory for tpu_custom_call.1']
    #allocation5 [shape = 'u8[512]{0}', space=vmem, size = 0x400, scoped, tag = 'output window, operand 0, single buffered']
    %6 = vsyncpa [#allocation3], 0
    %7 = vsyncpa [#allocation4], 0
    // Predicated region
    $region2: #{tpu_custom_call.1} parent=1 // pred_check
      _
    $region3: #{tpu_custom_call.1} parent=1 // pred_check_branch
      %9 = sbr.rel (0) target = $region5
    $region4: #{tpu_custom_call.1} parent=1 // pred_region
      %s10 = sadd.s32 0, 0
      %p11 = scmp.lt.s32.totalorder %s10, 0
      %s12 = scalar_select %p11, %s10, 0
      %s13 = smul.u32 2, %s12
      %15 = vsyncadd [#allocation3], 0
      %s16 = smul.addr %s13, 8
      %s17 = scalar_lea.hbm %s0, %s16
      %s18 = sshll.u32 %s17, 4
      %s19 = int_to_ptr.hbm [resolvable:$true] %s18
      %s20 = sshll.u32 [#allocation2], 4
      %s21 = int_to_ptr.vmem [resolvable:$true] %s20
      %26 = dma.hbm_to_vmem [thread:$0]  %s19, 256, %s21, [#allocation3], 128, 128, 8
    $region5: #{tpu_custom_call.1} parent=1 // pred_fallthru
      _
    // Predicated region
    $region6: #{tpu_custom_call.1} parent=1 // pred_check
      _
    $region7: #{tpu_custom_call.1} parent=1 // pred_check_branch
      %28 = sbr.rel (0) target = $region9
    $region8: #{tpu_custom_call.1} parent=1 // pred_region
      %30 = dma.done [#allocation3], 256
    $region9: #{tpu_custom_call.1} parent=1 // pred_fallthru
      _
    %s31 = sadd.s32 0, 0
    %p32 = scmp.lt.s32.totalorder %s31, 0
    %s33 = scalar_select %p32, %s31, 0
    %s34 = smul.u32 2, %s33
    %p35 = scmp.eq.s32.totalorder 0, 0
    // Predicated region
    $region10: #{tpu_custom_call.1} parent=1 // pred_check
      %p36 = pneg %p35
    $region11: #{tpu_custom_call.1} parent=1 // pred_check_branch
      %38 = sbr.rel (%p36) target = $region13
    $region12: #{tpu_custom_call.1} parent=1 // pred_region
      %39 = vst [vmem:[#allocation5] sm:$0x1] 0.0
    $region13: #{tpu_custom_call.1} parent=1 // pred_fallthru
      _
    %s40 = sadd.s32 0, 0
    %v41 = vld [vmem:[#allocation2] sm:$0xff]
    %v42 = vld [vmem:[#allocation2 + $0x8] sm:$0xff]
    %p43 = scmp.lt.s32.totalorder %s40, 0
    // Predicated region
    $region14: #{tpu_custom_call.1} parent=1 // pred_check
      %p44 = pneg %p43
    $region15: #{tpu_custom_call.1} parent=1 // pred_check_branch
      %46 = sbr.rel (%p44) target = $region17
    $region16: #{tpu_custom_call.1} parent=1 // pred_region
      %v47 = vld [vmem:[#allocation5] sm:$0x1]
      %v48 = vadd.f32 %v41, %v42
      %v49 = vrot.slane %v48, 4
      %v50 = vadd.f32 %v48, %v49
      %v51 = vrot.slane %v50, 2
      %v52 = vadd.f32 %v50, %v51
      %v53 = vrot.slane %v52, 1
      %v54 = vadd.f32 %v52, %v53
      %v55 = vadd.f32 %v47, %v54
      %56 = vst [vmem:[#allocation5] sm:$0x1] %v55
    $region17: #{tpu_custom_call.1} parent=1 // pred_fallthru
      _
    %p57 = scmp.ge.s32.totalorder %s40, 0
    // Predicated region
    $region18: #{tpu_custom_call.1} parent=1 // pred_check
      %p58 = pneg %p57
    $region19: #{tpu_custom_call.1} parent=1 // pred_check_branch
      %60 = sbr.rel (%p58) target = $region21
    $region20: #{tpu_custom_call.1} parent=1 // pred_region
      %s61 = smul.u32 %s40, 16
      %v62 = vlaneseq
      %v63 = vshrl.u32 %v62, 7
      %v64 = vadd.s32 %v63, 8
      %v65 = vstv %s61
      %v66 = vadd.s32 %v65, %v63
      %v67 = vadd.s32 %v65, %v64
      %vm68 = vcmp.lt.s32.totalorder %v66, 16
      %vm69 = vcmp.lt.s32.totalorder %v67, 16
      %v70 = vsel %vm68, %v41, 0.0
      %v71 = vsel %vm69, %v42, 0.0
      %v72 = vld [vmem:[#allocation5] sm:$0x1]
      %v73 = vadd.f32 %v70, %v71
      %v74 = vrot.slane %v73, 4
      %v75 = vadd.f32 %v73, %v74
      %v76 = vrot.slane %v75, 2
      %v77 = vadd.f32 %v75, %v76
      %v78 = vrot.slane %v77, 1
      %v79 = vadd.f32 %v77, %v78
      %v80 = vadd.f32 %v72, %v79
      %81 = vst [vmem:[#allocation5] sm:$0x1] %v80
    $region21: #{tpu_custom_call.1} parent=1 // pred_fallthru
      _
    // Predicated region
    $region22: #{tpu_custom_call.1} parent=1 // pred_check
      _
    $region23: #{tpu_custom_call.1} parent=1 // pred_check_branch
      %83 = sbr.rel (0) target = $region25
    $region24: #{tpu_custom_call.1} parent=1 // pred_region
      %85 = vsyncadd [#allocation4], 0
      %s87 = sshll.u32 [#allocation5], 4
      %s88 = int_to_ptr.vmem [resolvable:$true] %s87
      %s89 = sshll.u32 %s1, 4
      %s90 = int_to_ptr.hbm [resolvable:$true] %s89
      %92 = dma.vmem_to_hbm [thread:$0]  %s88, 16, %s90, [#allocation4]
    $region25: #{tpu_custom_call.1} parent=1 // pred_fallthru
      _
    // Predicated region
    $region26: #{tpu_custom_call.1} parent=1 // pred_check
      _
    $region27: #{tpu_custom_call.1} parent=1 // pred_check_branch
      %94 = sbr.rel (0) target = $region29
    $region28: #{tpu_custom_call.1} parent=1 // pred_region
      %96 = dma.done [#allocation4], 16
    $region29: #{tpu_custom_call.1} parent=1 // pred_fallthru
      _
    %97 = vsyncpa [#allocation3], 1
    %98 = vsyncpa [#allocation4], 1

</llo_original>
